<compile_context>
chip_gen: v7x
topology: tpu7x:2x2x1
jax: 0.10.0
libtpu: 0.0.40
codegen_flags: <defaults>
</compile_context>

<pallas_src>
import functools

import jax
import jax.numpy as jnp
from jax.experimental import pallas as pl
from jax.experimental.pallas import tpu as pltpu


def _biasfree_ln_rowwise_kernel(x_ref, w_ref, o_ref, *, C, eps):
    # x_ref: (T, C) tile; one LayerNorm row per sublane row. Used when C is a
    # multiple of 128 (already lane-dense) or as a general fallback.
    x = x_ref[...].astype(jnp.float32)
    inv_c = 1.0 / C
    mean = jnp.sum(x, axis=-1, keepdims=True) * inv_c
    ex2 = jnp.sum(x * x, axis=-1, keepdims=True) * inv_c
    var = jnp.maximum(ex2 - mean * mean, 0.0)       # biased variance
    y = x * jax.lax.rsqrt(var + eps)                # note: mean NOT subtracted (BiasFree)
    o_ref[...] = (y * w_ref[...].astype(jnp.float32)).astype(o_ref.dtype)


def _biasfree_ln_packed_kernel(x_ref, w_ref, s_ref, o_ref, *, C, eps):
    # x_ref: (T, W) tile with k = W // C independent rows packed along the 128 lanes.
    # s_ref: (W, W) block-diagonal 0/1 matrix (bf16); x @ S yields each C-wide group's
    #        sum broadcast to that group's lanes -> pure MXU, zero cross-lane XLU work,
    #        and every load/store stays lane-dense.
    x = x_ref[...].astype(jnp.float32)
    s = s_ref[...]

    def group_sum(v):
        # Exact hi/lo bf16 split (residual error ~2^-18 relative): accuracy does not
        # depend on the MXU's internal f32 matmul mode, and bf16 passes are cheapest.
        hi = v.astype(jnp.bfloat16)
        lo = (v - hi.astype(jnp.float32)).astype(jnp.bfloat16)
        return (jnp.dot(hi, s, preferred_element_type=jnp.float32)
                + jnp.dot(lo, s, preferred_element_type=jnp.float32))

    inv_c = 1.0 / C
    mean = group_sum(x) * inv_c
    ex2 = group_sum(x * x) * inv_c
    var = jnp.maximum(ex2 - mean * mean, 0.0)       # biased variance
    y = x * jax.lax.rsqrt(var + eps)                # mean NOT subtracted (BiasFree)
    o_ref[...] = (y * w_ref[...].astype(jnp.float32)).astype(o_ref.dtype)


def biasfree_layernorm(x, weight, *, target_tile_bytes=2 * 1024 * 1024):
    """x: (..., C) array, weight: (C,). Returns array with same shape/dtype as x."""
    orig_shape = x.shape
    C = orig_shape[-1]
    w_flat = weight.reshape(-1)
    assert w_flat.shape[0] == C, "weight must match normalized_shape"

    x2 = x.reshape(-1, C)          # free reshape (leading dims merged)
    R = x2.shape[0]

    itemsize = jnp.dtype(x.dtype).itemsize
    sublane = {4: 8, 2: 16, 1: 32}.get(itemsize, 8)

    LANES = 128
    # Lane packing: fold k independent rows into the 128-lane dim when C divides 128.
    # TODO(synk): widths like 48/96 could pack to 384 lanes, but the block-diagonal
    # matmul cost grows with the packed width, so we only pack when W == 128.
    k = 1
    if C < LANES and LANES % C == 0 and R % (LANES // C) == 0:
        k = LANES // C
    W = k * C
    Rk = R // k
    x_slab = x2.reshape(Rk, W)
    w_slab = jnp.tile(w_flat.reshape(1, C), (1, k))

    # Row-tile size: ~target_tile_bytes of f32 working set per block. Big enough to
    # amortize the ~0.35 us/step pipeline overhead (>=~85% of HBM roofline), small
    # enough that the block + its f32 temporaries + double buffers fit the 32 MiB
    # scoped-VMEM budget on v5e/v6e/v7x. For any input bigger than one tile the grid
    # has >=2 "parallel" steps, so v7x's two TensorCores both get work.
    lane_w = -(-W // LANES) * LANES                 # VMEM lane-padded width
    tile = (target_tile_bytes // (lane_w * 4)) // sublane * sublane
    tile = max(sublane, tile)
    if tile >= Rk:
        tile = Rk                                   # single full-extent block (legal)
    grid = (pl.cdiv(Rk, tile),)                     # partial last block: no host-side pad

    if k > 1:
        gid = jnp.arange(W, dtype=jnp.int32) // C
        smat = (gid[:, None] == gid[None, :]).astype(jnp.bfloat16)   # (W, W) 0/1
        kernel = functools.partial(_biasfree_ln_packed_kernel, C=C, eps=1e-5)
        in_specs = [
            pl.BlockSpec((tile, W), lambda i: (i, 0)),
            pl.BlockSpec((1, W), lambda i: (0, 0)),
            pl.BlockSpec((W, W), lambda i: (0, 0)),
        ]
        operands = (x_slab, w_slab, smat)
    else:
        kernel = functools.partial(_biasfree_ln_rowwise_kernel, C=C, eps=1e-5)
        in_specs = [
            pl.BlockSpec((tile, W), lambda i: (i, 0)),
            pl.BlockSpec((1, W), lambda i: (0, 0)),
        ]
        operands = (x_slab, w_slab)

    out = pl.pallas_call(
        kernel,
        out_shape=jax.ShapeDtypeStruct((Rk, W), x.dtype),
        grid_spec=pltpu.PrefetchScalarGridSpec(
            num_scalar_prefetch=0,
            grid=grid,
            in_specs=in_specs,
            out_specs=pl.BlockSpec((tile, W), lambda i: (i, 0)),
        ),
        compiler_params=pltpu.CompilerParams(
            dimension_semantics=("parallel",),
            vmem_limit_bytes=32 * 1024 * 1024,
        ),
    )(*operands)

    return out.reshape(orig_shape)


def biasfree_layernorm_ref(x, weight):
    # Pure-JAX reference mirroring the PyTorch forward.
    xf = x.astype(jnp.float32)
    sigma = jnp.var(xf, axis=-1, keepdims=True)     # biased
    return (xf / jnp.sqrt(sigma + 1e-5) * weight.astype(jnp.float32)).astype(x.dtype)


if __name__ == "__main__":
    key = jax.random.PRNGKey(0)
    k1, k2, k3 = jax.random.split(key, 3)

    # Typical Restormer usage: NCHW conv features (B, C, H, W) rearranged to
    # (B, H*W, C) before this LayerNorm.
    B, C, H, W = 2, 32, 16, 16
    x_nchw = jax.random.normal(k1, (B, C, H, W), dtype=jnp.float32)
    x = jnp.transpose(x_nchw, (0, 2, 3, 1)).reshape(B, H * W, C)       # (2, 256, 32)
    weight = jnp.ones((C,), dtype=jnp.float32)                         # torch.ones init

    y = jax.block_until_ready(biasfree_layernorm(x, weight))
    y_ref = biasfree_layernorm_ref(x, weight)
    assert y.shape == x.shape and y.dtype == x.dtype
    # Packed (lane-dense) path; bf16 hi/lo-split group sums keep error ~1e-6..1e-5.
    assert jnp.allclose(y, y_ref, atol=1e-4, rtol=1e-4)

    # Packed path again with a non-trivial weight (checks the tiled-weight layout).
    w_rand = 0.5 + jax.random.uniform(k3, (C,), dtype=jnp.float32)
    y3 = jax.block_until_ready(biasfree_layernorm(x, w_rand))
    assert jnp.allclose(y3, biasfree_layernorm_ref(x, w_rand), atol=1e-4, rtol=1e-4)

    # Row-wise fallback path (C does not divide 128).
    C2 = 48
    x2 = jax.random.normal(k2, (2, 8, C2), dtype=jnp.float32)
    w2 = 0.5 + jax.random.uniform(k3, (C2,), dtype=jnp.float32)
    y2 = jax.block_until_ready(biasfree_layernorm(x2, w2))
    assert jnp.allclose(y2, biasfree_layernorm_ref(x2, w2), atol=1e-4, rtol=1e-4)

    print("KERNEL_OK")
</pallas_src>

<mosaic_0001>
module attributes {stable_mosaic.version = 11 : i64} {
  func.func @_biasfree_ln_packed_kernel(%arg0: i32, %arg1: memref<128x128xf32, #tpu.memory_space<vmem>>, %arg2: memref<1x128xf32, #tpu.memory_space<vmem>>, %arg3: memref<128x128xbf16, #tpu.memory_space<vmem>>, %arg4: memref<128x128xf32, #tpu.memory_space<vmem>>) attributes {dimension_semantics = [#tpu.dimension_semantics<parallel>], iteration_bounds = array<i64: 1>, scalar_prefetch = 0 : i64, scratch_operands = 0 : i64, tpu.core_type = #tpu.core_type<tc>, window_params = [{transform_indices = @transform_0, window_bounds = array<i64: 128, 128>}, {pipeline_mode = #tpu.pipeline_mode<synchronous>, transform_indices = @transform_1, window_bounds = array<i64: 1, 128>}, {pipeline_mode = #tpu.pipeline_mode<synchronous>, transform_indices = @transform_2, window_bounds = array<i64: 128, 128>}, {transform_indices = @transform_3, window_bounds = array<i64: 128, 128>}]} {
    %c0 = arith.constant 0 : index
    %c0_0 = arith.constant 0 : index
    %0 = vector.load %arg1[%c0, %c0_0] : memref<128x128xf32, #tpu.memory_space<vmem>>, vector<128x128xf32>
    %c0_1 = arith.constant 0 : index
    %c0_2 = arith.constant 0 : index
    %1 = vector.load %arg3[%c0_1, %c0_2] : memref<128x128xbf16, #tpu.memory_space<vmem>>, vector<128x128xbf16>
    %2 = arith.truncf %0 : vector<128x128xf32> to vector<128x128xbf16>
    %3 = arith.extf %2 : vector<128x128xbf16> to vector<128x128xf32>
    %4 = arith.subf %0, %3 : vector<128x128xf32>
    %5 = arith.truncf %4 : vector<128x128xf32> to vector<128x128xbf16>
    %cst = arith.constant dense<0.000000e+00> : vector<128x128xf32>
    %6 = tpu.matmul %2, %1, %cst {dimension_numbers = #tpu.dot_dimension_numbers<[1], [0], [0], [1], [0, 0, 1, 1], [], []>} : vector<128x128xbf16>, vector<128x128xbf16>, vector<128x128xf32> -> vector<128x128xf32>
    %cst_3 = arith.constant dense<0.000000e+00> : vector<128x128xf32>
    %7 = tpu.matmul %5, %1, %cst_3 {dimension_numbers = #tpu.dot_dimension_numbers<[1], [0], [0], [1], [0, 0, 1, 1], [], []>} : vector<128x128xbf16>, vector<128x128xbf16>, vector<128x128xf32> -> vector<128x128xf32>
    %8 = arith.addf %6, %7 : vector<128x128xf32>
    %cst_4 = arith.constant 3.125000e-02 : f32
    %9 = vector.broadcast %cst_4 : f32 to vector<128x128xf32>
    %10 = arith.mulf %8, %9 : vector<128x128xf32>
    %11 = arith.mulf %0, %0 : vector<128x128xf32>
    %12 = arith.truncf %11 : vector<128x128xf32> to vector<128x128xbf16>
    %13 = arith.extf %12 : vector<128x128xbf16> to vector<128x128xf32>
    %14 = arith.subf %11, %13 : vector<128x128xf32>
    %15 = arith.truncf %14 : vector<128x128xf32> to vector<128x128xbf16>
    %cst_5 = arith.constant dense<0.000000e+00> : vector<128x128xf32>
    %16 = tpu.matmul %12, %1, %cst_5 {dimension_numbers = #tpu.dot_dimension_numbers<[1], [0], [0], [1], [0, 0, 1, 1], [], []>} : vector<128x128xbf16>, vector<128x128xbf16>, vector<128x128xf32> -> vector<128x128xf32>
    %cst_6 = arith.constant dense<0.000000e+00> : vector<128x128xf32>
    %17 = tpu.matmul %15, %1, %cst_6 {dimension_numbers = #tpu.dot_dimension_numbers<[1], [0], [0], [1], [0, 0, 1, 1], [], []>} : vector<128x128xbf16>, vector<128x128xbf16>, vector<128x128xf32> -> vector<128x128xf32>
    %18 = arith.addf %16, %17 : vector<128x128xf32>
    %cst_7 = arith.constant 3.125000e-02 : f32
    %19 = vector.broadcast %cst_7 : f32 to vector<128x128xf32>
    %20 = arith.mulf %18, %19 : vector<128x128xf32>
    %21 = arith.mulf %10, %10 : vector<128x128xf32>
    %22 = arith.subf %20, %21 : vector<128x128xf32>
    %cst_8 = arith.constant 0.000000e+00 : f32
    %23 = vector.broadcast %cst_8 : f32 to vector<128x128xf32>
    %24 = arith.maximumf %22, %23 : vector<128x128xf32>
    %cst_9 = arith.constant 9.99999974E-6 : f32
    %25 = vector.broadcast %cst_9 : f32 to vector<128x128xf32>
    %26 = arith.addf %24, %25 : vector<128x128xf32>
    %27 = math.rsqrt %26 : vector<128x128xf32>
    %28 = arith.mulf %0, %27 : vector<128x128xf32>
    %c0_10 = arith.constant 0 : index
    %c0_11 = arith.constant 0 : index
    %29 = vector.load %arg2[%c0_10, %c0_11] : memref<1x128xf32, #tpu.memory_space<vmem>>, vector<1x128xf32>
    %30 = vector.broadcast %29 : vector<1x128xf32> to vector<128x128xf32>
    %31 = arith.mulf %28, %30 : vector<128x128xf32>
    %c0_12 = arith.constant 0 : index
    %c0_13 = arith.constant 0 : index
    %32 = vector.load %arg4[%c0_12, %c0_13] : memref<128x128xf32, #tpu.memory_space<vmem>>, vector<128x128xf32>
    tpu.vector_store %arg4[%c0_12, %c0_13], %31 {strides = array<i32>} : memref<128x128xf32, #tpu.memory_space<vmem>>, vector<128x128xf32>,
    return
  }
  func.func @transform_0(%arg0: i32) -> (i32, i32) {
    %c0_i32 = arith.constant 0 : i32
    %c0_i32_0 = arith.constant 0 : i32
    return %arg0, %c0_i32 : i32, i32
  }
  func.func @transform_1(%arg0: i32) -> (i32, i32) {
    %c0_i32 = arith.constant 0 : i32
    %c0_i32_0 = arith.constant 0 : i32
    %c0_i32_1 = arith.constant 0 : i32
    return %c0_i32, %c0_i32_0 : i32, i32
  }
  func.func @transform_2(%arg0: i32) -> (i32, i32) {
    %c0_i32 = arith.constant 0 : i32
    %c0_i32_0 = arith.constant 0 : i32
    %c0_i32_1 = arith.constant 0 : i32
    return %c0_i32, %c0_i32_0 : i32, i32
  }
  func.func @transform_3(%arg0: i32) -> (i32, i32) {
    %c0_i32 = arith.constant 0 : i32
    %c0_i32_0 = arith.constant 0 : i32
    return %arg0, %c0_i32 : i32, i32
  }
}

</mosaic_0001>

<llo_original>
// kernel: tpu_custom_call.1
$region0: #{tpu_custom_call.1}
  #allocation0 [shape = 'u32[]', space=smem, size = 0x4, offset = 0x4, fixed_abs, tag = 'smem constant byte address 0x4 - core index']
  #allocation1 [shape = 'u32[144,128]{1,0:T(1,128)}', space=vmem, size = 0x12000, scoped, tag = 'internal scratch']
  %s0 = inlined_call_operand.hbm [shape: f32[128,128], index: 0, kind: input, shape index: {}]
  %s1 = inlined_call_operand.vmem [shape: f32[1,128], index: 1, kind: input, shape index: {}]
  %s2 = inlined_call_operand.hbm [shape: bf16[128,128], index: 2, kind: input, shape index: {}]
  %s3 = inlined_call_operand.hbm [shape: f32[128,128], index: 3, kind: output, shape index: {}]
  %s4 = sld [smem:[#allocation0]]
  $region30: #{tpu_custom_call.1} parent=0
    _
  %s6 = ssub.s32 1, %s4
  %s7 = scalar_select 0, %s6, %s4
  $region1: #{tpu_custom_call.1} parent=0
    #allocation2 [shape = 'u8[65536]{0}', space=vmem, size = 0x10000, scoped, tag = 'input window, operand 0, single buffered']
    #allocation3 [shape = 's32[1]{0}', space=sflag, size = 0x4, scoped, tag = 'scoped memory for tpu_custom_call.1']
    #allocation4 [shape = 's32[1]{0}', space=sflag, size = 0x4, scoped, tag = 'scoped memory for tpu_custom_call.1']
    #allocation5 [shape = 'u8[32768]{0}', space=vmem, size = 0x8000, scoped, tag = 'input window, operand 2, single buffered']
    #allocation6 [shape = 's32[1]{0}', space=sflag, size = 0x4, scoped, tag = 'scoped memory for tpu_custom_call.1']
    #allocation7 [shape = 'u8[65536]{0}', space=vmem, size = 0x10000, scoped, tag = 'output window, operand 0, single buffered']
    %8 = vsyncpa [#allocation3], 0
    %9 = vsyncpa [#allocation6], 0
    %10 = vsyncpa [#allocation4], 0
    // Predicated region
    $region2: #{tpu_custom_call.1} parent=1 // pred_check
      _
    $region3: #{tpu_custom_call.1} parent=1 // pred_check_branch
      %12 = sbr.rel (0) target = $region5
    $region4: #{tpu_custom_call.1} parent=1 // pred_region
      %s14 = ssub.s32 2048, 2048
      %15 = vsyncadd [#allocation3], %s14
      %s16 = sshll.u32 [#allocation2], 4
      %s17 = int_to_ptr.vmem [resolvable:$true] %s16
      %22 = dma.hbm_to_vmem [thread:$0]  %s0, 2048, %s17, [#allocation3], 128, 128, 8
    $region5: #{tpu_custom_call.1} parent=1 // pred_fallthru
      _
    // Predicated region
    $region6: #{tpu_custom_call.1} parent=1 // pred_check
      _
    $region7: #{tpu_custom_call.1} parent=1 // pred_check_branch
      %24 = sbr.rel (0) target = $region9
    $region8: #{tpu_custom_call.1} parent=1 // pred_region
      _
    $region9: #{tpu_custom_call.1} parent=1 // pred_fallthru
      _
    // Predicated region
    $region10: #{tpu_custom_call.1} parent=1 // pred_check
      _
    $region11: #{tpu_custom_call.1} parent=1 // pred_check_branch
      %26 = sbr.rel (0) target = $region13
    $region12: #{tpu_custom_call.1} parent=1 // pred_region
      %s28 = ssub.s32 1024, 1024
      %29 = vsyncadd [#allocation6], %s28
      %s30 = sshll.u32 [#allocation5], 4
      %s31 = int_to_ptr.vmem [resolvable:$true] %s30
      %36 = dma.hbm_to_vmem [thread:$0]  %s2, 1024, %s31, [#allocation6], 64, 64, 4
    $region13: #{tpu_custom_call.1} parent=1 // pred_fallthru
      _
    // Predicated region
    $region14: #{tpu_custom_call.1} parent=1 // pred_check
      _
    $region15: #{tpu_custom_call.1} parent=1 // pred_check_branch
      %38 = sbr.rel (0) target = $region17
    $region16: #{tpu_custom_call.1} parent=1 // pred_region
      %39 = dma.done [#allocation3], 2048
    $region17: #{tpu_custom_call.1} parent=1 // pred_fallthru
      _
    // Predicated region
    $region18: #{tpu_custom_call.1} parent=1 // pred_check
      _
    $region19: #{tpu_custom_call.1} parent=1 // pred_check_branch
      %41 = sbr.rel (0) target = $region21
    $region20: #{tpu_custom_call.1} parent=1 // pred_region
      %42 = dma.done [#allocation6], 1024
    $region21: #{tpu_custom_call.1} parent=1 // pred_fallthru
      _
    %v44 = vld [vmem:[#allocation2] sm:$0xff]
    %v45 = vld [vmem:[#allocation2 + $0x8] sm:$0xff]
    %v46 = vld [vmem:[#allocation2 + $0x10] sm:$0xff]
    %v47 = vld [vmem:[#allocation2 + $0x18] sm:$0xff]
    %v48 = vld [vmem:[#allocation2 + $0x20] sm:$0xff]
    %v49 = vld [vmem:[#allocation2 + $0x28] sm:$0xff]
    %v50 = vld [vmem:[#allocation2 + $0x30] sm:$0xff]
    %v51 = vld [vmem:[#allocation2 + $0x38] sm:$0xff]
    %v52 = vld [vmem:[#allocation2 + $0x40] sm:$0xff]
    %v53 = vld [vmem:[#allocation2 + $0x48] sm:$0xff]
    %v54 = vld [vmem:[#allocation2 + $0x50] sm:$0xff]
    %v55 = vld [vmem:[#allocation2 + $0x58] sm:$0xff]
    %v56 = vld [vmem:[#allocation2 + $0x60] sm:$0xff]
    %v57 = vld [vmem:[#allocation2 + $0x68] sm:$0xff]
    %v58 = vld [vmem:[#allocation2 + $0x70] sm:$0xff]
    %v59 = vld [vmem:[#allocation2 + $0x78] sm:$0xff]
    %v60 = vld [vmem:[#allocation5] sm:$0xf]
    %v61 = vld [vmem:[#allocation5 + $0x4] sm:$0xf]
    %v62 = vld [vmem:[#allocation5 + $0x8] sm:$0xf]
    %v63 = vld [vmem:[#allocation5 + $0xc] sm:$0xf]
    %v64 = vld [vmem:[#allocation5 + $0x10] sm:$0xf]
    %v65 = vld [vmem:[#allocation5 + $0x14] sm:$0xf]
    %v66 = vld [vmem:[#allocation5 + $0x18] sm:$0xf]
    %v67 = vld [vmem:[#allocation5 + $0x1c] sm:$0xf]
    %v68 = vld [vmem:[#allocation5 + $0x20] sm:$0xf]
    %v69 = vld [vmem:[#allocation5 + $0x24] sm:$0xf]
    %v70 = vld [vmem:[#allocation5 + $0x28] sm:$0xf]
    %v71 = vld [vmem:[#allocation5 + $0x2c] sm:$0xf]
    %v72 = vld [vmem:[#allocation5 + $0x30] sm:$0xf]
    %v73 = vld [vmem:[#allocation5 + $0x34] sm:$0xf]
    %v74 = vld [vmem:[#allocation5 + $0x38] sm:$0xf]
    %v75 = vld [vmem:[#allocation5 + $0x3c] sm:$0xf]
    %v76 = vpack.c.bf16 %v45, %v44
    %v77 = vpack.c.bf16 %v47, %v46
    %v78 = vpack.c.bf16 %v49, %v48
    %v79 = vpack.c.bf16 %v51, %v50
    %v80 = vpack.c.bf16 %v53, %v52
    %v81 = vpack.c.bf16 %v55, %v54
    %v82 = vpack.c.bf16 %v57, %v56
    %v83 = vpack.c.bf16 %v59, %v58
    %v84 = vunpack.c.l.bf16 %v76
    %v85 = vunpack.c.h.bf16 %v76
    %v86 = vunpack.c.l.bf16 %v77
    %v87 = vunpack.c.h.bf16 %v77
    %v88 = vunpack.c.l.bf16 %v78
    %v89 = vunpack.c.h.bf16 %v78
    %v90 = vunpack.c.l.bf16 %v79
    %v91 = vunpack.c.h.bf16 %v79
    %v92 = vunpack.c.l.bf16 %v80
    %v93 = vunpack.c.h.bf16 %v80
    %v94 = vunpack.c.l.bf16 %v81
    %v95 = vunpack.c.h.bf16 %v81
    %v96 = vunpack.c.l.bf16 %v82
    %v97 = vunpack.c.h.bf16 %v82
    %v98 = vunpack.c.l.bf16 %v83
    %v99 = vunpack.c.h.bf16 %v83
    %v100 = vsub.f32 %v44, %v84
    %v101 = vsub.f32 %v45, %v85
    %v102 = vsub.f32 %v46, %v86
    %v103 = vsub.f32 %v47, %v87
    %v104 = vsub.f32 %v48, %v88
    %v105 = vsub.f32 %v49, %v89
    %v106 = vsub.f32 %v50, %v90
    %v107 = vsub.f32 %v51, %v91
    %v108 = vsub.f32 %v52, %v92
    %v109 = vsub.f32 %v53, %v93
    %v110 = vsub.f32 %v54, %v94
    %v111 = vsub.f32 %v55, %v95
    %v112 = vsub.f32 %v56, %v96
    %v113 = vsub.f32 %v57, %v97
    %v114 = vsub.f32 %v58, %v98
    %v115 = vsub.f32 %v59, %v99
    %v116 = vpack.c.bf16 %v101, %v100
    %v117 = vpack.c.bf16 %v103, %v102
    %v118 = vpack.c.bf16 %v105, %v104
    %v119 = vpack.c.bf16 %v107, %v106
    %v120 = vpack.c.bf16 %v109, %v108
    %v121 = vpack.c.bf16 %v111, %v110
    %v122 = vpack.c.bf16 %v113, %v112
    %v123 = vpack.c.bf16 %v115, %v114
    %v140 = vunpack.c.l.b16 %v60
    %v141 = vunpack.c.l.b16 %v61
    %v142 = vunpack.c.l.b16 %v62
    %v143 = vunpack.c.l.b16 %v63
    %v144 = vunpack.c.l.b16 %v64
    %v145 = vunpack.c.l.b16 %v65
    %v146 = vunpack.c.l.b16 %v66
    %v147 = vunpack.c.l.b16 %v67
    %v148 = vunpack.c.l.b16 %v68
    %v149 = vunpack.c.l.b16 %v69
    %v150 = vunpack.c.l.b16 %v70
    %v151 = vunpack.c.l.b16 %v71
    %v152 = vunpack.c.l.b16 %v72
    %v153 = vunpack.c.l.b16 %v73
    %v154 = vunpack.c.l.b16 %v74
    %v155 = vunpack.c.l.b16 %v75
    %v156 = vpack.c.b16 %v141, %v140
    %v157 = vpack.c.b16 %v143, %v142
    %v158 = vpack.c.b16 %v145, %v144
    %v159 = vpack.c.b16 %v147, %v146
    %v160 = vpack.c.b16 %v149, %v148
    %v161 = vpack.c.b16 %v151, %v150
    %v162 = vpack.c.b16 %v153, %v152
    %v163 = vpack.c.b16 %v155, %v154
    %172 = vmatprep.subr.bf16.mxu0 0
    %173 = vmatpush1.bf16.msra.mxu0 %v156
    %174 = vmatprep.subr.bf16.mxu0 0
    %175 = vmatpush1.bf16.msra.mxu0 %v157
    %176 = vmatprep.subr.bf16.mxu0 0
    %177 = vmatpush1.bf16.msra.mxu0 %v158
    %178 = vmatprep.subr.bf16.mxu0 0
    %179 = vmatpush1.bf16.msra.mxu0 %v159
    %180 = vmatprep.subr.bf16.mxu0 0
    %181 = vmatpush1.bf16.msra.mxu0 %v160
    %182 = vmatprep.subr.bf16.mxu0 0
    %183 = vmatpush1.bf16.msra.mxu0 %v161
    %184 = vmatprep.subr.bf16.mxu0 0
    %185 = vmatpush1.bf16.msra.mxu0 %v162
    %186 = vmatprep.subr.bf16.mxu0 0
    %187 = vmatpush1.bf16.msra.mxu0 %v163
    %188 = vmatprep.subr.bf16.mxu0 0
    %189 = vmatpush1.bf16.msra.mxu0 0
    %190 = vmatprep.subr.bf16.mxu0 0
    %191 = vmatpush1.bf16.msra.mxu0 0
    %192 = vmatprep.subr.bf16.mxu0 0
    %193 = vmatpush1.bf16.msra.mxu0 0
    %194 = vmatprep.subr.bf16.mxu0 0
    %195 = vmatpush1.bf16.msra.mxu0 0
    %196 = vmatprep.subr.bf16.mxu0 0
    %197 = vmatpush1.bf16.msra.mxu0 0
    %198 = vmatprep.subr.bf16.mxu0 0
    %199 = vmatpush1.bf16.msra.mxu0 0
    %200 = vmatprep.subr.bf16.mxu0 0
    %201 = vmatpush1.bf16.msra.mxu0 0
    %202 = vmatprep.subr.bf16.mxu0 0
    %203 = vmatpush1.bf16.msra.mxu0 0
    %204 = vmatprep.mubr.bf16.mxu0 0
    %205 = vmatmul.mubr.bf16.gmra.mrb[0].mxu0 %v116
    %v206 = vpop.f32.mrb[0].mxu0
    %v207 = vadd.f32 0.0, %v206
    %v208 = vpop.f32.mrb[0].mxu0
    %v209 = vpop.f32.mrb[0].mxu0
    %v210 = vadd.f32 0.0, %v209
    %v211 = vpop.f32.mrb[0].mxu0
    %212 = vmatprep.mubr.bf16.mxu0 0
    %213 = vmatmul.mubr.bf16.gmra.mrb[0].mxu0 %v117
    %v214 = vpop.f32.mrb[0].mxu0
    %v215 = vadd.f32 0.0, %v214
    %v216 = vpop.f32.mrb[0].mxu0
    %v217 = vpop.f32.mrb[0].mxu0
    %v218 = vadd.f32 0.0, %v217
    %v219 = vpop.f32.mrb[0].mxu0
    %220 = vmatprep.mubr.bf16.mxu0 0
    %221 = vmatmul.mubr.bf16.gmra.mrb[0].mxu0 %v118
    %v222 = vpop.f32.mrb[0].mxu0
    %v223 = vadd.f32 0.0, %v222
    %v224 = vpop.f32.mrb[0].mxu0
    %v225 = vpop.f32.mrb[0].mxu0
    %v226 = vadd.f32 0.0, %v225
    %v227 = vpop.f32.mrb[0].mxu0
    %228 = vmatprep.mubr.bf16.mxu0 0
    %229 = vmatmul.mubr.bf16.gmra.mrb[0].mxu0 %v119
    %v230 = vpop.f32.mrb[0].mxu0
    %v231 = vadd.f32 0.0, %v230
    %v232 = vpop.f32.mrb[0].mxu0
    %v233 = vpop.f32.mrb[0].mxu0
    %v234 = vadd.f32 0.0, %v233
    %v235 = vpop.f32.mrb[0].mxu0
    %236 = vmatprep.mubr.bf16.mxu0 0
    %237 = vmatmul.mubr.bf16.gmra.mrb[0].mxu0 %v120
    %v238 = vpop.f32.mrb[0].mxu0
    %v239 = vadd.f32 0.0, %v238
    %v240 = vpop.f32.mrb[0].mxu0
    %v241 = vpop.f32.mrb[0].mxu0
    %v242 = vadd.f32 0.0, %v241
    %v243 = vpop.f32.mrb[0].mxu0
    %244 = vmatprep.mubr.bf16.mxu0 0
    %245 = vmatmul.mubr.bf16.gmra.mrb[0].mxu0 %v121
    %v246 = vpop.f32.mrb[0].mxu0
    %v247 = vadd.f32 0.0, %v246
    %v248 = vpop.f32.mrb[0].mxu0
    %v249 = vpop.f32.mrb[0].mxu0
    %v250 = vadd.f32 0.0, %v249
    %v251 = vpop.f32.mrb[0].mxu0
    %252 = vmatprep.mubr.bf16.mxu0 0
    %253 = vmatmul.mubr.bf16.gmra.mrb[0].mxu0 %v122
    %v254 = vpop.f32.mrb[0].mxu0
    %v255 = vadd.f32 0.0, %v254
    %v256 = vpop.f32.mrb[0].mxu0
    %v257 = vpop.f32.mrb[0].mxu0
    %v258 = vadd.f32 0.0, %v257
    %v259 = vpop.f32.mrb[0].mxu0
    %260 = vmatprep.mubr.bf16.mxu0 0
    %261 = vmatmul.mubr.bf16.gmra.mrb[0].mxu0 %v123
    %v262 = vpop.f32.mrb[0].mxu0
    %v263 = vadd.f32 0.0, %v262
    %v264 = vpop.f32.mrb[0].mxu0
    %v265 = vpop.f32.mrb[0].mxu0
    %v266 = vadd.f32 0.0, %v265
    %v267 = vpop.f32.mrb[0].mxu0
    %268 = vdwg.mxu0
    %269 = vmatprep.subr.bf16.mxu0 0
    %270 = vmatpush1.bf16.msra.mxu0 %v156
    %271 = vmatprep.subr.bf16.mxu0 0
    %272 = vmatpush1.bf16.msra.mxu0 %v157
    %273 = vmatprep.subr.bf16.mxu0 0
    %274 = vmatpush1.bf16.msra.mxu0 %v158
    %275 = vmatprep.subr.bf16.mxu0 0
    %276 = vmatpush1.bf16.msra.mxu0 %v159
    %277 = vmatprep.subr.bf16.mxu0 0
    %278 = vmatpush1.bf16.msra.mxu0 %v160
    %279 = vmatprep.subr.bf16.mxu0 0
    %280 = vmatpush1.bf16.msra.mxu0 %v161
    %281 = vmatprep.subr.bf16.mxu0 0
    %282 = vmatpush1.bf16.msra.mxu0 %v162
    %283 = vmatprep.subr.bf16.mxu0 0
    %284 = vmatpush1.bf16.msra.mxu0 %v163
    %285 = vmatprep.subr.bf16.mxu0 0
    %286 = vmatpush1.bf16.msra.mxu0 0
    %287 = vmatprep.subr.bf16.mxu0 0
    %288 = vmatpush1.bf16.msra.mxu0 0
    %289 = vmatprep.subr.bf16.mxu0 0
    %290 = vmatpush1.bf16.msra.mxu0 0
    %291 = vmatprep.subr.bf16.mxu0 0
    %292 = vmatpush1.bf16.msra.mxu0 0
    %293 = vmatprep.subr.bf16.mxu0 0
    %294 = vmatpush1.bf16.msra.mxu0 0
    %295 = vmatprep.subr.bf16.mxu0 0
    %296 = vmatpush1.bf16.msra.mxu0 0
    %297 = vmatprep.subr.bf16.mxu0 0
    %298 = vmatpush1.bf16.msra.mxu0 0
    %299 = vmatprep.subr.bf16.mxu0 0
    %300 = vmatpush1.bf16.msra.mxu0 0
    %301 = vmatprep.mubr.bf16.mxu0 0
    %302 = vmatmul.mubr.bf16.gmra.mrb[0].mxu0 %v76
    %v303 = vpop.f32.mrb[0].mxu0
    %v304 = vadd.f32 %v207, %v303
    %v305 = vpop.f32.mrb[0].mxu0
    %v306 = vpop.f32.mrb[0].mxu0
    %v307 = vadd.f32 %v210, %v306
    %v308 = vpop.f32.mrb[0].mxu0
    %309 = vmatprep.mubr.bf16.mxu0 0
    %310 = vmatmul.mubr.bf16.gmra.mrb[0].mxu0 %v77
    %v311 = vpop.f32.mrb[0].mxu0
    %v312 = vadd.f32 %v215, %v311
    %v313 = vpop.f32.mrb[0].mxu0
    %v314 = vpop.f32.mrb[0].mxu0
    %v315 = vadd.f32 %v218, %v314
    %v316 = vpop.f32.mrb[0].mxu0
    %317 = vmatprep.mubr.bf16.mxu0 0
    %318 = vmatmul.mubr.bf16.gmra.mrb[0].mxu0 %v78
    %v319 = vpop.f32.mrb[0].mxu0
    %v320 = vadd.f32 %v223, %v319
    %v321 = vpop.f32.mrb[0].mxu0
    %v322 = vpop.f32.mrb[0].mxu0
    %v323 = vadd.f32 %v226, %v322
    %v324 = vpop.f32.mrb[0].mxu0
    %325 = vmatprep.mubr.bf16.mxu0 0
    %326 = vmatmul.mubr.bf16.gmra.mrb[0].mxu0 %v79
    %v327 = vpop.f32.mrb[0].mxu0
    %v328 = vadd.f32 %v231, %v327
    %v329 = vpop.f32.mrb[0].mxu0
    %v330 = vpop.f32.mrb[0].mxu0
    %v331 = vadd.f32 %v234, %v330
    %v332 = vpop.f32.mrb[0].mxu0
    %333 = vmatprep.mubr.bf16.mxu0 0
    %334 = vmatmul.mubr.bf16.gmra.mrb[0].mxu0 %v80
    %v335 = vpop.f32.mrb[0].mxu0
    %v336 = vadd.f32 %v239, %v335
    %v337 = vpop.f32.mrb[0].mxu0
    %v338 = vpop.f32.mrb[0].mxu0
    %v339 = vadd.f32 %v242, %v338
    %v340 = vpop.f32.mrb[0].mxu0
    %341 = vmatprep.mubr.bf16.mxu0 0
    %342 = vmatmul.mubr.bf16.gmra.mrb[0].mxu0 %v81
    %v343 = vpop.f32.mrb[0].mxu0
    %v344 = vadd.f32 %v247, %v343
    %v345 = vpop.f32.mrb[0].mxu0
    %v346 = vpop.f32.mrb[0].mxu0
    %v347 = vadd.f32 %v250, %v346
    %v348 = vpop.f32.mrb[0].mxu0
    %349 = vmatprep.mubr.bf16.mxu0 0
    %350 = vmatmul.mubr.bf16.gmra.mrb[0].mxu0 %v82
    %v351 = vpop.f32.mrb[0].mxu0
    %v352 = vadd.f32 %v255, %v351
    %v353 = vpop.f32.mrb[0].mxu0
    %v354 = vpop.f32.mrb[0].mxu0
    %v355 = vadd.f32 %v258, %v354
    %v356 = vpop.f32.mrb[0].mxu0
    %357 = vmatprep.mubr.bf16.mxu0 0
    %358 = vmatmul.mubr.bf16.gmra.mrb[0].mxu0 %v83
    %v359 = vpop.f32.mrb[0].mxu0
    %v360 = vadd.f32 %v263, %v359
    %v361 = vpop.f32.mrb[0].mxu0
    %v362 = vpop.f32.mrb[0].mxu0
    %v363 = vadd.f32 %v266, %v362
    %v364 = vpop.f32.mrb[0].mxu0
    %365 = vdwg.mxu0
    %v366 = vmul.f32 %v304, 0.03125
    %v367 = vmul.f32 %v307, 0.03125
    %v368 = vmul.f32 %v312, 0.03125
    %v369 = vmul.f32 %v315, 0.03125
    %v370 = vmul.f32 %v320, 0.03125
    %v371 = vmul.f32 %v323, 0.03125
    %v372 = vmul.f32 %v328, 0.03125
    %v373 = vmul.f32 %v331, 0.03125
    %v374 = vmul.f32 %v336, 0.03125
    %v375 = vmul.f32 %v339, 0.03125
    %v376 = vmul.f32 %v344, 0.03125
    %v377 = vmul.f32 %v347, 0.03125
    %v378 = vmul.f32 %v352, 0.03125
    %v379 = vmul.f32 %v355, 0.03125
    %v380 = vmul.f32 %v360, 0.03125
    %v381 = vmul.f32 %v363, 0.03125
    %v382 = vmul.f32 %v44, %v44
    %v383 = vmul.f32 %v45, %v45
    %v384 = vmul.f32 %v46, %v46
    %v385 = vmul.f32 %v47, %v47
    %v386 = vmul.f32 %v48, %v48
    %v387 = vmul.f32 %v49, %v49
    %v388 = vmul.f32 %v50, %v50
    %v389 = vmul.f32 %v51, %v51
    %v390 = vmul.f32 %v52, %v52
    %v391 = vmul.f32 %v53, %v53
    %v392 = vmul.f32 %v54, %v54
    %v393 = vmul.f32 %v55, %v55
    %v394 = vmul.f32 %v56, %v56
    %v395 = vmul.f32 %v57, %v57
    %v396 = vmul.f32 %v58, %v58
    %v397 = vmul.f32 %v59, %v59
    %v398 = vpack.c.bf16 %v383, %v382
    %v399 = vpack.c.bf16 %v385, %v384
    %v400 = vpack.c.bf16 %v387, %v386
    %v401 = vpack.c.bf16 %v389, %v388
    %v402 = vpack.c.bf16 %v391, %v390
    %v403 = vpack.c.bf16 %v393, %v392
    %v404 = vpack.c.bf16 %v395, %v394
    %v405 = vpack.c.bf16 %v397, %v396
    %v406 = vunpack.c.l.bf16 %v398
    %v407 = vunpack.c.h.bf16 %v398
    %v408 = vunpack.c.l.bf16 %v399
    %v409 = vunpack.c.h.bf16 %v399
    %v410 = vunpack.c.l.bf16 %v400
    %v411 = vunpack.c.h.bf16 %v400
    %v412 = vunpack.c.l.bf16 %v401
    %v413 = vunpack.c.h.bf16 %v401
    %v414 = vunpack.c.l.bf16 %v402
    %v415 = vunpack.c.h.bf16 %v402
    %v416 = vunpack.c.l.bf16 %v403
    %v417 = vunpack.c.h.bf16 %v403
    %v418 = vunpack.c.l.bf16 %v404
    %v419 = vunpack.c.h.bf16 %v404
    %v420 = vunpack.c.l.bf16 %v405
    %v421 = vunpack.c.h.bf16 %v405
    %v422 = vsub.f32 %v382, %v406
    %v423 = vsub.f32 %v383, %v407
    %v424 = vsub.f32 %v384, %v408
    %v425 = vsub.f32 %v385, %v409
    %v426 = vsub.f32 %v386, %v410
    %v427 = vsub.f32 %v387, %v411
    %v428 = vsub.f32 %v388, %v412
    %v429 = vsub.f32 %v389, %v413
    %v430 = vsub.f32 %v390, %v414
    %v431 = vsub.f32 %v391, %v415
    %v432 = vsub.f32 %v392, %v416
    %v433 = vsub.f32 %v393, %v417
    %v434 = vsub.f32 %v394, %v418
    %v435 = vsub.f32 %v395, %v419
    %v436 = vsub.f32 %v396, %v420
    %v437 = vsub.f32 %v397, %v421
    %v438 = vpack.c.bf16 %v423, %v422
    %v439 = vpack.c.bf16 %v425, %v424
    %v440 = vpack.c.bf16 %v427, %v426
    %v441 = vpack.c.bf16 %v429, %v428
    %v442 = vpack.c.bf16 %v431, %v430
    %v443 = vpack.c.bf16 %v433, %v432
    %v444 = vpack.c.bf16 %v435, %v434
    %v445 = vpack.c.bf16 %v437, %v436
    %446 = vmatprep.subr.bf16.mxu0 0
    %447 = vmatpush1.bf16.msra.mxu0 %v156
    %448 = vmatprep.subr.bf16.mxu0 0
    %449 = vmatpush1.bf16.msra.mxu0 %v157
    %450 = vmatprep.subr.bf16.mxu0 0
    %451 = vmatpush1.bf16.msra.mxu0 %v158
    %452 = vmatprep.subr.bf16.mxu0 0
    %453 = vmatpush1.bf16.msra.mxu0 %v159
    %454 = vmatprep.subr.bf16.mxu0 0
    %455 = vmatpush1.bf16.msra.mxu0 %v160
    %456 = vmatprep.subr.bf16.mxu0 0
    %457 = vmatpush1.bf16.msra.mxu0 %v161
    %458 = vmatprep.subr.bf16.mxu0 0
    %459 = vmatpush1.bf16.msra.mxu0 %v162
    %460 = vmatprep.subr.bf16.mxu0 0
    %461 = vmatpush1.bf16.msra.mxu0 %v163
    %462 = vmatprep.subr.bf16.mxu0 0
    %463 = vmatpush1.bf16.msra.mxu0 0
    %464 = vmatprep.subr.bf16.mxu0 0
    %465 = vmatpush1.bf16.msra.mxu0 0
    %466 = vmatprep.subr.bf16.mxu0 0
    %467 = vmatpush1.bf16.msra.mxu0 0
    %468 = vmatprep.subr.bf16.mxu0 0
    %469 = vmatpush1.bf16.msra.mxu0 0
    %470 = vmatprep.subr.bf16.mxu0 0
    %471 = vmatpush1.bf16.msra.mxu0 0
    %472 = vmatprep.subr.bf16.mxu0 0
    %473 = vmatpush1.bf16.msra.mxu0 0
    %474 = vmatprep.subr.bf16.mxu0 0
    %475 = vmatpush1.bf16.msra.mxu0 0
    %476 = vmatprep.subr.bf16.mxu0 0
    %477 = vmatpush1.bf16.msra.mxu0 0
    %478 = vmatprep.mubr.bf16.mxu0 0
    %479 = vmatmul.mubr.bf16.gmra.mrb[0].mxu0 %v438
    %v480 = vpop.f32.mrb[0].mxu0
    %v481 = vadd.f32 0.0, %v480
    %v482 = vpop.f32.mrb[0].mxu0
    %v483 = vpop.f32.mrb[0].mxu0
    %v484 = vadd.f32 0.0, %v483
    %v485 = vpop.f32.mrb[0].mxu0
    %486 = vmatprep.mubr.bf16.mxu0 0
    %487 = vmatmul.mubr.bf16.gmra.mrb[0].mxu0 %v439
    %v488 = vpop.f32.mrb[0].mxu0
    %v489 = vadd.f32 0.0, %v488
    %v490 = vpop.f32.mrb[0].mxu0
    %v491 = vpop.f32.mrb[0].mxu0
    %v492 = vadd.f32 0.0, %v491
    %v493 = vpop.f32.mrb[0].mxu0
    %494 = vmatprep.mubr.bf16.mxu0 0
    %495 = vmatmul.mubr.bf16.gmra.mrb[0].mxu0 %v440
    %v496 = vpop.f32.mrb[0].mxu0
    %v497 = vadd.f32 0.0, %v496
    %v498 = vpop.f32.mrb[0].mxu0
    %v499 = vpop.f32.mrb[0].mxu0
    %v500 = vadd.f32 0.0, %v499
    %v501 = vpop.f32.mrb[0].mxu0
    %502 = vmatprep.mubr.bf16.mxu0 0
    %503 = vmatmul.mubr.bf16.gmra.mrb[0].mxu0 %v441
    %v504 = vpop.f32.mrb[0].mxu0
    %v505 = vadd.f32 0.0, %v504
    %v506 = vpop.f32.mrb[0].mxu0
    %v507 = vpop.f32.mrb[0].mxu0
    %v508 = vadd.f32 0.0, %v507
    %v509 = vpop.f32.mrb[0].mxu0
    %510 = vmatprep.mubr.bf16.mxu0 0
    %511 = vmatmul.mubr.bf16.gmra.mrb[0].mxu0 %v442
    %v512 = vpop.f32.mrb[0].mxu0
    %v513 = vadd.f32 0.0, %v512
    %v514 = vpop.f32.mrb[0].mxu0
    %v515 = vpop.f32.mrb[0].mxu0
    %v516 = vadd.f32 0.0, %v515
    %v517 = vpop.f32.mrb[0].mxu0
    %518 = vmatprep.mubr.bf16.mxu0 0
    %519 = vmatmul.mubr.bf16.gmra.mrb[0].mxu0 %v443
    %v520 = vpop.f32.mrb[0].mxu0
    %v521 = vadd.f32 0.0, %v520
    %v522 = vpop.f32.mrb[0].mxu0
    %v523 = vpop.f32.mrb[0].mxu0
    %v524 = vadd.f32 0.0, %v523
    %v525 = vpop.f32.mrb[0].mxu0
    %526 = vmatprep.mubr.bf16.mxu0 0
    %527 = vmatmul.mubr.bf16.gmra.mrb[0].mxu0 %v444
    %v528 = vpop.f32.mrb[0].mxu0
    %v529 = vadd.f32 0.0, %v528
    %v530 = vpop.f32.mrb[0].mxu0
    %v531 = vpop.f32.mrb[0].mxu0
    %v532 = vadd.f32 0.0, %v531
    %v533 = vpop.f32.mrb[0].mxu0
    %534 = vmatprep.mubr.bf16.mxu0 0
    %535 = vmatmul.mubr.bf16.gmra.mrb[0].mxu0 %v445
    %v536 = vpop.f32.mrb[0].mxu0
    %v537 = vadd.f32 0.0, %v536
    %v538 = vpop.f32.mrb[0].mxu0
    %v539 = vpop.f32.mrb[0].mxu0
    %v540 = vadd.f32 0.0, %v539
    %v541 = vpop.f32.mrb[0].mxu0
    %542 = vdwg.mxu0
    %543 = vmatprep.subr.bf16.mxu0 0
    %544 = vmatpush1.bf16.msra.mxu0 %v156
    %545 = vmatprep.subr.bf16.mxu0 0
    %546 = vmatpush1.bf16.msra.mxu0 %v157
    %547 = vmatprep.subr.bf16.mxu0 0
    %548 = vmatpush1.bf16.msra.mxu0 %v158
    %549 = vmatprep.subr.bf16.mxu0 0
    %550 = vmatpush1.bf16.msra.mxu0 %v159
    %551 = vmatprep.subr.bf16.mxu0 0
    %552 = vmatpush1.bf16.msra.mxu0 %v160
    %553 = vmatprep.subr.bf16.mxu0 0
    %554 = vmatpush1.bf16.msra.mxu0 %v161
    %555 = vmatprep.subr.bf16.mxu0 0
    %556 = vmatpush1.bf16.msra.mxu0 %v162
    %557 = vmatprep.subr.bf16.mxu0 0
    %558 = vmatpush1.bf16.msra.mxu0 %v163
    %559 = vmatprep.subr.bf16.mxu0 0
    %560 = vmatpush1.bf16.msra.mxu0 0
    %561 = vmatprep.subr.bf16.mxu0 0
    %562 = vmatpush1.bf16.msra.mxu0 0
    %563 = vmatprep.subr.bf16.mxu0 0
    %564 = vmatpush1.bf16.msra.mxu0 0
    %565 = vmatprep.subr.bf16.mxu0 0
    %566 = vmatpush1.bf16.msra.mxu0 0
    %567 = vmatprep.subr.bf16.mxu0 0
    %568 = vmatpush1.bf16.msra.mxu0 0
    %569 = vmatprep.subr.bf16.mxu0 0
    %570 = vmatpush1.bf16.msra.mxu0 0
    %571 = vmatprep.subr.bf16.mxu0 0
    %572 = vmatpush1.bf16.msra.mxu0 0
    %573 = vmatprep.subr.bf16.mxu0 0
    %574 = vmatpush1.bf16.msra.mxu0 0
    %575 = vmatprep.mubr.bf16.mxu0 0
    %576 = vmatmul.mubr.bf16.gmra.mrb[0].mxu0 %v398
    %v577 = vpop.f32.mrb[0].mxu0
    %v578 = vadd.f32 %v481, %v577
    %v579 = vpop.f32.mrb[0].mxu0
    %v580 = vpop.f32.mrb[0].mxu0
    %v581 = vadd.f32 %v484, %v580
    %v582 = vpop.f32.mrb[0].mxu0
    %583 = vmatprep.mubr.bf16.mxu0 0
    %584 = vmatmul.mubr.bf16.gmra.mrb[0].mxu0 %v399
    %v585 = vpop.f32.mrb[0].mxu0
    %v586 = vadd.f32 %v489, %v585
    %v587 = vpop.f32.mrb[0].mxu0
    %v588 = vpop.f32.mrb[0].mxu0
    %v589 = vadd.f32 %v492, %v588
    %v590 = vpop.f32.mrb[0].mxu0
    %591 = vmatprep.mubr.bf16.mxu0 0
    %592 = vmatmul.mubr.bf16.gmra.mrb[0].mxu0 %v400
    %v593 = vpop.f32.mrb[0].mxu0
    %v594 = vadd.f32 %v497, %v593
    %v595 = vpop.f32.mrb[0].mxu0
    %v596 = vpop.f32.mrb[0].mxu0
    %v597 = vadd.f32 %v500, %v596
    %v598 = vpop.f32.mrb[0].mxu0
    %599 = vmatprep.mubr.bf16.mxu0 0
    %600 = vmatmul.mubr.bf16.gmra.mrb[0].mxu0 %v401
    %v601 = vpop.f32.mrb[0].mxu0
    %v602 = vadd.f32 %v505, %v601
    %v603 = vpop.f32.mrb[0].mxu0
    %v604 = vpop.f32.mrb[0].mxu0
    %v605 = vadd.f32 %v508, %v604
    %v606 = vpop.f32.mrb[0].mxu0
    %607 = vmatprep.mubr.bf16.mxu0 0
    %608 = vmatmul.mubr.bf16.gmra.mrb[0].mxu0 %v402
    %v609 = vpop.f32.mrb[0].mxu0
    %v610 = vadd.f32 %v513, %v609
    %v611 = vpop.f32.mrb[0].mxu0
    %v612 = vpop.f32.mrb[0].mxu0
    %v613 = vadd.f32 %v516, %v612
    %v614 = vpop.f32.mrb[0].mxu0
    %615 = vmatprep.mubr.bf16.mxu0 0
    %616 = vmatmul.mubr.bf16.gmra.mrb[0].mxu0 %v403
    %v617 = vpop.f32.mrb[0].mxu0
    %v618 = vadd.f32 %v521, %v617
    %v619 = vpop.f32.mrb[0].mxu0
    %v620 = vpop.f32.mrb[0].mxu0
    %v621 = vadd.f32 %v524, %v620
    %v622 = vpop.f32.mrb[0].mxu0
    %623 = vmatprep.mubr.bf16.mxu0 0
    %624 = vmatmul.mubr.bf16.gmra.mrb[0].mxu0 %v404
    %v625 = vpop.f32.mrb[0].mxu0
    %v626 = vadd.f32 %v529, %v625
    %v627 = vpop.f32.mrb[0].mxu0
    %v628 = vpop.f32.mrb[0].mxu0
    %v629 = vadd.f32 %v532, %v628
    %v630 = vpop.f32.mrb[0].mxu0
    %631 = vmatprep.mubr.bf16.mxu0 0
    %632 = vmatmul.mubr.bf16.gmra.mrb[0].mxu0 %v405
    %v633 = vpop.f32.mrb[0].mxu0
    %v634 = vadd.f32 %v537, %v633
    %v635 = vpop.f32.mrb[0].mxu0
    %v636 = vpop.f32.mrb[0].mxu0
    %v637 = vadd.f32 %v540, %v636
    %v638 = vpop.f32.mrb[0].mxu0
    %639 = vdwg.mxu0
    %v640 = vmul.f32 %v578, 0.03125
    %v641 = vmul.f32 %v581, 0.03125
    %v642 = vmul.f32 %v586, 0.03125
    %v643 = vmul.f32 %v589, 0.03125
    %v644 = vmul.f32 %v594, 0.03125
    %v645 = vmul.f32 %v597, 0.03125
    %v646 = vmul.f32 %v602, 0.03125
    %v647 = vmul.f32 %v605, 0.03125
    %v648 = vmul.f32 %v610, 0.03125
    %v649 = vmul.f32 %v613, 0.03125
    %v650 = vmul.f32 %v618, 0.03125
    %v651 = vmul.f32 %v621, 0.03125
    %v652 = vmul.f32 %v626, 0.03125
    %v653 = vmul.f32 %v629, 0.03125
    %v654 = vmul.f32 %v634, 0.03125
    %v655 = vmul.f32 %v637, 0.03125
    %v656 = vmul.f32 %v366, %v366
    %v657 = vmul.f32 %v367, %v367
    %v658 = vmul.f32 %v368, %v368
    %v659 = vmul.f32 %v369, %v369
    %v660 = vmul.f32 %v370, %v370
    %v661 = vmul.f32 %v371, %v371
    %v662 = vmul.f32 %v372, %v372
    %v663 = vmul.f32 %v373, %v373
    %v664 = vmul.f32 %v374, %v374
    %v665 = vmul.f32 %v375, %v375
    %v666 = vmul.f32 %v376, %v376
    %v667 = vmul.f32 %v377, %v377
    %v668 = vmul.f32 %v378, %v378
    %v669 = vmul.f32 %v379, %v379
    %v670 = vmul.f32 %v380, %v380
    %v671 = vmul.f32 %v381, %v381
    %v672 = vsub.f32 %v640, %v656
    %v673 = vsub.f32 %v641, %v657
    %v674 = vsub.f32 %v642, %v658
    %v675 = vsub.f32 %v643, %v659
    %v676 = vsub.f32 %v644, %v660
    %v677 = vsub.f32 %v645, %v661
    %v678 = vsub.f32 %v646, %v662
    %v679 = vsub.f32 %v647, %v663
    %v680 = vsub.f32 %v648, %v664
    %v681 = vsub.f32 %v649, %v665
    %v682 = vsub.f32 %v650, %v666
    %v683 = vsub.f32 %v651, %v667
    %v684 = vsub.f32 %v652, %v668
    %v685 = vsub.f32 %v653, %v669
    %v686 = vsub.f32 %v654, %v670
    %v687 = vsub.f32 %v655, %v671
    %v688 = vmax.f32 %v672, 0.0
    %v689 = vmax.f32 %v673, 0.0
    %v690 = vmax.f32 %v674, 0.0
    %v691 = vmax.f32 %v675, 0.0
    %v692 = vmax.f32 %v676, 0.0
    %v693 = vmax.f32 %v677, 0.0
    %v694 = vmax.f32 %v678, 0.0
    %v695 = vmax.f32 %v679, 0.0
    %v696 = vmax.f32 %v680, 0.0
    %v697 = vmax.f32 %v681, 0.0
    %v698 = vmax.f32 %v682, 0.0
    %v699 = vmax.f32 %v683, 0.0
    %v700 = vmax.f32 %v684, 0.0
    %v701 = vmax.f32 %v685, 0.0
    %v702 = vmax.f32 %v686, 0.0
    %v703 = vmax.f32 %v687, 0.0
    %v704 = vadd.f32 %v688, 1e-05
    %v705 = vadd.f32 %v689, 1e-05
    %v706 = vadd.f32 %v690, 1e-05
    %v707 = vadd.f32 %v691, 1e-05
    %v708 = vadd.f32 %v692, 1e-05
    %v709 = vadd.f32 %v693, 1e-05
    %v710 = vadd.f32 %v694, 1e-05
    %v711 = vadd.f32 %v695, 1e-05
    %v712 = vadd.f32 %v696, 1e-05
    %v713 = vadd.f32 %v697, 1e-05
    %v714 = vadd.f32 %v698, 1e-05
    %v715 = vadd.f32 %v699, 1e-05
    %v716 = vadd.f32 %v700, 1e-05
    %v717 = vadd.f32 %v701, 1e-05
    %v718 = vadd.f32 %v702, 1e-05
    %v719 = vadd.f32 %v703, 1e-05
    %v720 = vrsqrt.pop %v704
    %v721 = vrsqrt.pop %v705
    %v722 = vrsqrt.pop %v706
    %v723 = vrsqrt.pop %v707
    %v724 = vrsqrt.pop %v708
    %v725 = vrsqrt.pop %v709
    %v726 = vrsqrt.pop %v710
    %v727 = vrsqrt.pop %v711
    %v728 = vrsqrt.pop %v712
    %v729 = vrsqrt.pop %v713
    %v730 = vrsqrt.pop %v714
    %v731 = vrsqrt.pop %v715
    %v732 = vrsqrt.pop %v716
    %v733 = vrsqrt.pop %v717
    %v734 = vrsqrt.pop %v718
    %v735 = vrsqrt.pop %v719
    %v736 = vmul.f32 %v44, %v720
    %v737 = vmul.f32 %v45, %v721
    %v738 = vmul.f32 %v46, %v722
    %v739 = vmul.f32 %v47, %v723
    %v740 = vmul.f32 %v48, %v724
    %v741 = vmul.f32 %v49, %v725
    %v742 = vmul.f32 %v50, %v726
    %v743 = vmul.f32 %v51, %v727
    %v744 = vmul.f32 %v52, %v728
    %v745 = vmul.f32 %v53, %v729
    %v746 = vmul.f32 %v54, %v730
    %v747 = vmul.f32 %v55, %v731
    %v748 = vmul.f32 %v56, %v732
    %v749 = vmul.f32 %v57, %v733
    %v750 = vmul.f32 %v58, %v734
    %v751 = vmul.f32 %v59, %v735
    %v752 = vld [vmem:[%s1] sm:$0x1]
    %v754 = vlaneseq
    %v755 = vshrl.u32 %v754, 7
    %v756 = vsub.s32 0, %v755
    %v757 = vrot.slane %v752, %v756
    %v759 = vmul.f32 %v736, %v757
    %v760 = vmul.f32 %v737, %v757
    %v761 = vmul.f32 %v738, %v757
    %v762 = vmul.f32 %v739, %v757
    %v763 = vmul.f32 %v740, %v757
    %v764 = vmul.f32 %v741, %v757
    %v765 = vmul.f32 %v742, %v757
    %v766 = vmul.f32 %v743, %v757
    %v767 = vmul.f32 %v744, %v757
    %v768 = vmul.f32 %v745, %v757
    %v769 = vmul.f32 %v746, %v757
    %v770 = vmul.f32 %v747, %v757
    %v771 = vmul.f32 %v748, %v757
    %v772 = vmul.f32 %v749, %v757
    %v773 = vmul.f32 %v750, %v757
    %v774 = vmul.f32 %v751, %v757
    %775 = vst [vmem:[#allocation7] sm:$0xff] %v759
    %776 = vst [vmem:[#allocation7 + $0x8] sm:$0xff] %v760
    %777 = vst [vmem:[#allocation7 + $0x10] sm:$0xff] %v761
    %778 = vst [vmem:[#allocation7 + $0x18] sm:$0xff] %v762
    %779 = vst [vmem:[#allocation7 + $0x20] sm:$0xff] %v763
    %780 = vst [vmem:[#allocation7 + $0x28] sm:$0xff] %v764
    %781 = vst [vmem:[#allocation7 + $0x30] sm:$0xff] %v765
    %782 = vst [vmem:[#allocation7 + $0x38] sm:$0xff] %v766
    %783 = vst [vmem:[#allocation7 + $0x40] sm:$0xff] %v767
    %784 = vst [vmem:[#allocation7 + $0x48] sm:$0xff] %v768
    %785 = vst [vmem:[#allocation7 + $0x50] sm:$0xff] %v769
    %786 = vst [vmem:[#allocation7 + $0x58] sm:$0xff] %v770
    %787 = vst [vmem:[#allocation7 + $0x60] sm:$0xff] %v771
    %788 = vst [vmem:[#allocation7 + $0x68] sm:$0xff] %v772
    %789 = vst [vmem:[#allocation7 + $0x70] sm:$0xff] %v773
    %790 = vst [vmem:[#allocation7 + $0x78] sm:$0xff] %v774
    // Predicated region
    $region22: #{tpu_custom_call.1} parent=1 // pred_check
      _
    $region23: #{tpu_custom_call.1} parent=1 // pred_check_branch
      %792 = sbr.rel (0) target = $region25
    $region24: #{tpu_custom_call.1} parent=1 // pred_region
      %s794 = ssub.s32 2048, 2048
      %795 = vsyncadd [#allocation4], %s794
      %s796 = sshll.u32 [#allocation7], 4
      %s797 = int_to_ptr.vmem [resolvable:$true] %s796
      %802 = dma.vmem_to_hbm [thread:$0]  %s797, 2048, %s3, [#allocation4], 128, 128, 8
    $region25: #{tpu_custom_call.1} parent=1 // pred_fallthru
      _
    // Predicated region
    $region26: #{tpu_custom_call.1} parent=1 // pred_check
      _
    $region27: #{tpu_custom_call.1} parent=1 // pred_check_branch
      %804 = sbr.rel (0) target = $region29
    $region28: #{tpu_custom_call.1} parent=1 // pred_region
      %805 = dma.done [#allocation4], 2048
    $region29: #{tpu_custom_call.1} parent=1 // pred_fallthru
      _
    %806 = vsyncpa [#allocation3], 1
    %807 = vsyncpa [#allocation6], 1
    %808 = vsyncpa [#allocation4], 1

</llo_original>
